<compile_context>
chip_gen: v6e
topology: v6e:2x2x1
jax: 0.10.0
libtpu: 0.0.40
codegen_flags: <defaults>
</compile_context>

<pallas_src>
import functools
import math

import jax
import jax.numpy as jnp
from jax.experimental import pallas as pl
from jax.experimental.pallas import tpu as pltpu

_LANE = 128


def _round_up(x, m):
    return ((x + m - 1) // m) * m


def _pad2(a, rows, cols):
    pr, pc = rows - a.shape[0], cols - a.shape[1]
    if pr == 0 and pc == 0:
        return a
    return jnp.pad(a, ((0, pr), (0, pc)))


# --------------------------------------------------------------------------
# One-time hardware / capability introspection
# --------------------------------------------------------------------------
@functools.lru_cache(maxsize=1)
def _vmem_capacity_bytes():
    try:
        return int(pltpu.get_tpu_info().vmem_capacity_bytes)
    except Exception:
        pass
    try:
        kind = jax.devices()[0].device_kind.lower()
    except Exception:
        kind = ""
    if any(t in kind for t in ("v4", "v5", "v6")):
        return 128 * 1024 * 1024
    # v7x has 64 MiB/TC; also the safe default when undetectable.
    return 64 * 1024 * 1024


def _vmem_budget_and_limit():
    cap = _vmem_capacity_bytes()
    return int(cap * 0.70), int(cap * 0.85)


@functools.lru_cache(maxsize=1)
def _buffered_one_supported():
    """One-time capability probe: does this jax/Mosaic accept pl.Buffered(1)?"""
    try:
        def _copy(x_ref, o_ref):
            o_ref[...] = x_ref[...]

        fn = pl.pallas_call(
            _copy,
            out_shape=jax.ShapeDtypeStruct((8, 128), jnp.float32),
            grid=(1,),
            in_specs=[pl.BlockSpec((8, 128), lambda i: (0, 0),
                                   pipeline_mode=pl.Buffered(1))],
            out_specs=pl.BlockSpec((8, 128), lambda i: (0, 0)),
        )
        jax.jit(fn).lower(jax.ShapeDtypeStruct((8, 128), jnp.float32)).compile()
        return True
    except Exception:
        return False


# --------------------------------------------------------------------------
# Kernels
# --------------------------------------------------------------------------
def _mlp_kernel_resident(x_ref, w1_ref, b1_ref, w2_ref, b2_ref, o_ref):
    """Weights fully VMEM-resident; grid = (row_tiles,). No accumulator RMW."""
    h = jnp.dot(x_ref[...], w1_ref[...], preferred_element_type=jnp.float32)
    h = jnp.maximum(h + b1_ref[...], 0.0)            # bias + ReLU in f32
    # Dropout(p=0.0) is identity.
    o = jnp.dot(h.astype(w2_ref.dtype), w2_ref[...],
                preferred_element_type=jnp.float32)
    o_ref[...] = (o + b2_ref[...]).astype(o_ref.dtype)


def _mlp_kernel_ktiled(x_ref, w1_ref, b1_ref, w2_ref, b2_ref, o_ref, acc_ref):
    """Hidden dim K-tiled; grid = (row_tiles, hidden_chunks); k axis is the reduction."""
    k = pl.program_id(1)

    @pl.when(k == 0)
    def _():
        acc_ref[...] = jnp.zeros_like(acc_ref)

    h = jnp.dot(x_ref[...], w1_ref[...], preferred_element_type=jnp.float32)
    h = jnp.maximum(h + b1_ref[...], 0.0)
    acc_ref[...] += jnp.dot(h.astype(w2_ref.dtype), w2_ref[...],
                            preferred_element_type=jnp.float32)

    @pl.when(k == pl.num_programs(1) - 1)
    def _():
        o_ref[...] = (acc_ref[...] + b2_ref[...]).astype(o_ref.dtype)


# --------------------------------------------------------------------------
# Wrapper
# --------------------------------------------------------------------------
def make_mlp(w1, b1, w2, b2, *, compute_dtype=jnp.bfloat16,
             row_tile=None, force_hidden_tile=None):
    """Pre-pads/casts the MLP weights once and returns a jitted apply(h).

    Implements the PyTorch MLP forward for num_layers_hidden=1, activation='relu',
    dropout=0 (identity): relu(h @ W1 + b1) @ W2 + b2.
    Weights are (dim_in, dim_hidden) / (dim_hidden, dim_out), i.e. x @ W + b.
    compute_dtype feeds the MXU (bf16 by default); accumulation is always f32.
    """
    # TODO(synk): activation='softplus' and num_layers_hidden != 1 variants of the
    # module are not fused here (only the default relu, single-hidden-layer stack).
    w1 = jnp.asarray(w1); b1 = jnp.asarray(b1)
    w2 = jnp.asarray(w2); b2 = jnp.asarray(b2)
    dim_in, dim_hidden = w1.shape
    dim_out = w2.shape[1]

    din_p = _round_up(dim_in, _LANE)
    dhid_p = _round_up(dim_hidden, _LANE)
    dout_p = _round_up(dim_out, _LANE)

    comp_bytes = jnp.dtype(compute_dtype).itemsize
    sub = {1: 32, 2: 16}.get(comp_bytes, 8)          # sublane pack of compute dtype
    vmem_budget, vmem_limit = _vmem_budget_and_limit()

    # --- residency decision: weights DMA'd once per call when they fit ------
    w_bytes = (din_p * dhid_p + dhid_p * dout_p) * comp_bytes
    resident, use_buf1 = False, False
    if force_hidden_tile is None:
        if 2 * w_bytes <= vmem_budget // 2:           # fits even double-buffered
            resident = True
            use_buf1 = _buffered_one_supported()
        elif w_bytes <= vmem_budget // 2 and _buffered_one_supported():
            resident, use_buf1 = True, True

    if resident:
        hid_tile = dhid_p
    else:
        hid_tile = force_hidden_tile if force_hidden_tile is not None else 512
        hid_tile = min(_round_up(hid_tile, _LANE), dhid_p)
        dhid_p = _round_up(dhid_p, hid_tile)
    n_hid_chunks = dhid_p // hid_tile

    if row_tile is None:
        # Larger row tiles when weights are streamed (K-tiled) so arithmetic
        # intensity (~rt flop/byte) clears the v6e/v7x HBM roofline.
        row_tile = 256 if resident else 512
    row_tile = max(_round_up(row_tile, sub), sub)

    # --- one-time pad / cast of the weights (hoisted out of the hot path) ---
    # Zero padding preserves the math: padded input/weight columns contribute
    # zero, padded hidden units are relu(0 + 0) = 0 against zero W2 rows.
    w1_p = _pad2(w1, din_p, dhid_p).astype(compute_dtype)
    w2_p = _pad2(w2, dhid_p, dout_p).astype(compute_dtype)
    b1_p = _pad2(b1.reshape(1, -1), 1, dhid_p).astype(jnp.float32)
    b2_p = _pad2(b2.reshape(1, -1), 1, dout_p).astype(jnp.float32)

    def _vmem_est(rt):
        x = 2 * rt * din_p * comp_bytes                      # double-buffered x
        out = 2 * rt * dout_p * 4                            # output (f32 worst case)
        if resident:
            w = (1 if use_buf1 else 2) * w_bytes
            acc = 0
            inter = rt * dhid_p * (4 + comp_bytes)           # hidden activation temp
        else:
            w = 2 * (din_p * hid_tile + hid_tile * dout_p) * comp_bytes
            acc = rt * dout_p * 4
            inter = rt * hid_tile * (4 + comp_bytes)
        bias = 4 * (dhid_p + dout_p) * 4
        return x + out + w + acc + inter + bias

    def _wspec(shape, imap):
        if use_buf1:
            return pl.BlockSpec(shape, imap, pipeline_mode=pl.Buffered(1))
        return pl.BlockSpec(shape, imap)

    def _forward(h, w1_p, b1_p, w2_p, b2_p):
        orig_shape = h.shape
        out_dtype = h.dtype
        x = h.reshape(-1, dim_in)
        n_rows = x.shape[0]

        rows_pack = _round_up(n_rows, sub)
        rt = min(row_tile, rows_pack)
        # v7x megacore: make sure the (parallel) row axis has >= 2 tiles.
        if rows_pack // rt < 2 and rt >= 2 * sub and n_rows > sub:
            rt = _round_up(rt // 2, sub)
        # Shrink the row tile until the pipeline fits the VMEM budget.
        while rt > sub and _vmem_est(rt) > vmem_budget:
            rt = _round_up(rt // 2, sub)
        # TODO(synk): for outputs so wide that even rt == sub blows VMEM, add a
        # third (parallel) grid axis tiling dout instead of shrinking rt further.

        n_rows_p = _round_up(n_rows, rt)
        n_row_tiles = n_rows_p // rt

        x_p = _pad2(x, n_rows_p, din_p).astype(compute_dtype)

        if resident:
            grid_spec = pltpu.PrefetchScalarGridSpec(
                num_scalar_prefetch=0,
                grid=(n_row_tiles,),
                in_specs=[
                    pl.BlockSpec((rt, din_p), lambda i: (i, 0)),
                    _wspec((din_p, dhid_p), lambda i: (0, 0)),
                    _wspec((1, dhid_p), lambda i: (0, 0)),
                    _wspec((dhid_p, dout_p), lambda i: (0, 0)),
                    _wspec((1, dout_p), lambda i: (0, 0)),
                ],
                out_specs=pl.BlockSpec((rt, dout_p), lambda i: (i, 0)),
            )
            kernel = _mlp_kernel_resident
            dims = ("parallel",)
        else:
            grid_spec = pltpu.PrefetchScalarGridSpec(
                num_scalar_prefetch=0,
                grid=(n_row_tiles, n_hid_chunks),            # reduction axis last
                in_specs=[
                    pl.BlockSpec((rt, din_p), lambda i, k: (i, 0)),
                    pl.BlockSpec((din_p, hid_tile), lambda i, k: (0, k)),
                    pl.BlockSpec((1, hid_tile), lambda i, k: (0, k)),
                    pl.BlockSpec((hid_tile, dout_p), lambda i, k: (k, 0)),
                    pl.BlockSpec((1, dout_p), lambda i, k: (0, 0)),
                ],
                out_specs=pl.BlockSpec((rt, dout_p), lambda i, k: (i, 0)),
                scratch_shapes=[pltpu.VMEM((rt, dout_p), jnp.float32)],
            )
            kernel = _mlp_kernel_ktiled
            dims = ("parallel", "arbitrary")

        out_p = pl.pallas_call(
            kernel,
            out_shape=jax.ShapeDtypeStruct((n_rows_p, dout_p), out_dtype),
            grid_spec=grid_spec,
            compiler_params=pltpu.CompilerParams(
                dimension_semantics=dims,
                vmem_limit_bytes=vmem_limit,
            ),
        )(x_p, w1_p, b1_p, w2_p, b2_p)

        out = out_p[:n_rows, :dim_out]
        return out.reshape(*orig_shape[:-1], dim_out)

    forward_jit = jax.jit(_forward)

    def apply(h):
        return forward_jit(h, w1_p, b1_p, w2_p, b2_p)

    return apply


def mlp_pallas(h, w1, b1, w2, b2, **kwargs):
    """One-shot convenience wrapper; prefer make_mlp(...) to amortize weight prep."""
    return make_mlp(w1, b1, w2, b2, **kwargs)(h)


# --------------------------------------------------------------------------
# Reference + init
# --------------------------------------------------------------------------
def init_mlp_params(key, dim_in, dim_hidden, dim_out, dtype=jnp.float32):
    """Deterministic init mimicking torch.nn.Linear; weights stored as (in, out)."""
    k1, k2, k3, k4 = jax.random.split(key, 4)
    bound1 = 1.0 / math.sqrt(dim_in)
    w1 = jax.random.uniform(k1, (dim_in, dim_hidden), dtype, -bound1, bound1)
    b1 = jax.random.uniform(k2, (dim_hidden,), dtype, -bound1, bound1)
    bound2 = 1.0 / math.sqrt(dim_hidden)
    w2 = jax.random.uniform(k3, (dim_hidden, dim_out), dtype, -bound2, bound2)
    b2 = jax.random.uniform(k4, (dim_out,), dtype, -bound2, bound2)
    return w1, b1, w2, b2


def mlp_reference(h, w1, b1, w2, b2):
    """Pure-JAX reference of the PyTorch MLP forward (num_layers_hidden=1, relu, p=0)."""
    x = jnp.maximum(h @ w1 + b1, 0.0)
    return x @ w2 + b2


if __name__ == "__main__":
    key = jax.random.PRNGKey(0)
    k_p1, k_x1, k_p2, k_x2 = jax.random.split(key, 4)

    # Test 1: small aligned shapes, resident-weight path, default bf16 MXU dtype.
    dim_in, dim_hidden, dim_out = 32, 64, 32
    w1, b1, w2, b2 = init_mlp_params(k_p1, dim_in, dim_hidden, dim_out)
    h = jax.random.normal(k_x1, (2, 8, dim_in), dtype=jnp.float32)

    mlp1 = make_mlp(w1, b1, w2, b2)                  # bf16 MXU, f32 accumulate
    out = jax.block_until_ready(mlp1(h))
    ref = mlp_reference(h, w1, b1, w2, b2)
    assert out.shape == (2, 8, dim_out)
    assert jnp.allclose(out, ref, atol=5e-2, rtol=5e-2), "Pallas MLP (bf16) mismatch"

    # Test 2: unaligned dims, forced K-tiled hidden path, f32 MXU dtype (tight check).
    dim_in2, dim_hidden2, dim_out2 = 48, 320, 40
    w1b, b1b, w2b, b2b = init_mlp_params(k_p2, dim_in2, dim_hidden2, dim_out2)
    h2 = jax.random.normal(k_x2, (3, 7, dim_in2), dtype=jnp.float32)

    mlp2 = make_mlp(w1b, b1b, w2b, b2b, compute_dtype=jnp.float32,
                    force_hidden_tile=128)
    out2 = jax.block_until_ready(mlp2(h2))
    ref2 = mlp_reference(h2, w1b, b1b, w2b, b2b)
    assert out2.shape == (3, 7, dim_out2)
    assert jnp.allclose(out2, ref2, atol=1e-4, rtol=1e-4), "Pallas MLP (f32) mismatch"

    print("KERNEL_OK")
</pallas_src>

<mosaic_0001>
module attributes {stable_mosaic.version = 11 : i64} {
  func.func @_mlp_kernel_resident(%arg0: i32, %arg1: memref<16x128xbf16, #tpu.memory_space<vmem>>, %arg2: memref<128x128xbf16, #tpu.memory_space<vmem>>, %arg3: memref<1x128xf32, #tpu.memory_space<vmem>>, %arg4: memref<128x128xbf16, #tpu.memory_space<vmem>>, %arg5: memref<1x128xf32, #tpu.memory_space<vmem>>, %arg6: memref<16x128xf32, #tpu.memory_space<vmem>>) attributes {dimension_semantics = [#tpu.dimension_semantics<parallel>], iteration_bounds = array<i64: 1>, scalar_prefetch = 0 : i64, scratch_operands = 0 : i64, tpu.core_type = #tpu.core_type<tc>, window_params = [{transform_indices = @transform_0, window_bounds = array<i64: 16, 128>}, {pipeline_mode = #tpu.pipeline_mode<synchronous>, transform_indices = @transform_1, window_bounds = array<i64: 128, 128>}, {pipeline_mode = #tpu.pipeline_mode<synchronous>, transform_indices = @transform_2, window_bounds = array<i64: 1, 128>}, {pipeline_mode = #tpu.pipeline_mode<synchronous>, transform_indices = @transform_3, window_bounds = array<i64: 128, 128>}, {pipeline_mode = #tpu.pipeline_mode<synchronous>, transform_indices = @transform_4, window_bounds = array<i64: 1, 128>}, {transform_indices = @transform_5, window_bounds = array<i64: 16, 128>}]} {
    %c0 = arith.constant 0 : index
    %c0_0 = arith.constant 0 : index
    %0 = vector.load %arg1[%c0, %c0_0] : memref<16x128xbf16, #tpu.memory_space<vmem>>, vector<16x128xbf16>
    %c0_1 = arith.constant 0 : index
    %c0_2 = arith.constant 0 : index
    %1 = vector.load %arg2[%c0_1, %c0_2] : memref<128x128xbf16, #tpu.memory_space<vmem>>, vector<128x128xbf16>
    %cst = arith.constant dense<0.000000e+00> : vector<16x128xf32>
    %2 = tpu.matmul %0, %1, %cst {dimension_numbers = #tpu.dot_dimension_numbers<[1], [0], [0], [1], [0, 0, 1, 1], [], []>} : vector<16x128xbf16>, vector<128x128xbf16>, vector<16x128xf32> -> vector<16x128xf32>
    %c0_3 = arith.constant 0 : index
    %c0_4 = arith.constant 0 : index
    %3 = vector.load %arg3[%c0_3, %c0_4] : memref<1x128xf32, #tpu.memory_space<vmem>>, vector<1x128xf32>
    %4 = vector.broadcast %3 : vector<1x128xf32> to vector<16x128xf32>
    %5 = arith.addf %2, %4 : vector<16x128xf32>
    %cst_5 = arith.constant 0.000000e+00 : f32
    %6 = vector.broadcast %cst_5 : f32 to vector<16x128xf32>
    %7 = arith.maximumf %5, %6 : vector<16x128xf32>
    %8 = arith.truncf %7 : vector<16x128xf32> to vector<16x128xbf16>
    %c0_6 = arith.constant 0 : index
    %c0_7 = arith.constant 0 : index
    %9 = vector.load %arg4[%c0_6, %c0_7] : memref<128x128xbf16, #tpu.memory_space<vmem>>, vector<128x128xbf16>
    %cst_8 = arith.constant dense<0.000000e+00> : vector<16x128xf32>
    %10 = tpu.matmul %8, %9, %cst_8 {dimension_numbers = #tpu.dot_dimension_numbers<[1], [0], [0], [1], [0, 0, 1, 1], [], []>} : vector<16x128xbf16>, vector<128x128xbf16>, vector<16x128xf32> -> vector<16x128xf32>
    %c0_9 = arith.constant 0 : index
    %c0_10 = arith.constant 0 : index
    %11 = vector.load %arg5[%c0_9, %c0_10] : memref<1x128xf32, #tpu.memory_space<vmem>>, vector<1x128xf32>
    %12 = vector.broadcast %11 : vector<1x128xf32> to vector<16x128xf32>
    %13 = arith.addf %10, %12 : vector<16x128xf32>
    %c0_11 = arith.constant 0 : index
    %c0_12 = arith.constant 0 : index
    %14 = vector.load %arg6[%c0_11, %c0_12] : memref<16x128xf32, #tpu.memory_space<vmem>>, vector<16x128xf32>
    tpu.vector_store %arg6[%c0_11, %c0_12], %13 {strides = array<i32>} : memref<16x128xf32, #tpu.memory_space<vmem>>, vector<16x128xf32>,
    return
  }
  func.func @transform_0(%arg0: i32) -> (i32, i32) {
    %c0_i32 = arith.constant 0 : i32
    %c0_i32_0 = arith.constant 0 : i32
    return %arg0, %c0_i32 : i32, i32
  }
  func.func @transform_1(%arg0: i32) -> (i32, i32) {
    %c0_i32 = arith.constant 0 : i32
    %c0_i32_0 = arith.constant 0 : i32
    %c0_i32_1 = arith.constant 0 : i32
    return %c0_i32, %c0_i32_0 : i32, i32
  }
  func.func @transform_2(%arg0: i32) -> (i32, i32) {
    %c0_i32 = arith.constant 0 : i32
    %c0_i32_0 = arith.constant 0 : i32
    %c0_i32_1 = arith.constant 0 : i32
    return %c0_i32, %c0_i32_0 : i32, i32
  }
  func.func @transform_3(%arg0: i32) -> (i32, i32) {
    %c0_i32 = arith.constant 0 : i32
    %c0_i32_0 = arith.constant 0 : i32
    %c0_i32_1 = arith.constant 0 : i32
    return %c0_i32, %c0_i32_0 : i32, i32
  }
  func.func @transform_4(%arg0: i32) -> (i32, i32) {
    %c0_i32 = arith.constant 0 : i32
    %c0_i32_0 = arith.constant 0 : i32
    %c0_i32_1 = arith.constant 0 : i32
    return %c0_i32, %c0_i32_0 : i32, i32
  }
  func.func @transform_5(%arg0: i32) -> (i32, i32) {
    %c0_i32 = arith.constant 0 : i32
    %c0_i32_0 = arith.constant 0 : i32
    return %arg0, %c0_i32 : i32, i32
  }
}

</mosaic_0001>

<llo_original>
// kernel: _forward.1
$region0: #{_forward.1}
  #allocation0 [shape = 'u32[]', space=smem, size = 0x4, offset = 0x4, fixed_abs, tag = 'smem constant byte address 0x4 - core index']
  #allocation1 [shape = 'u32[144,128]{1,0:T(1,128)}', space=vmem, size = 0x12000, scoped, tag = 'internal scratch']
  %s0 = inlined_call_operand.vmem [shape: bf16[16,128], index: 0, kind: input, shape index: {}]
  %s1 = inlined_call_operand.hbm [shape: bf16[128,128], index: 1, kind: input, shape index: {}]
  %s2 = inlined_call_operand.vmem [shape: f32[1,128], index: 2, kind: input, shape index: {}]
  %s3 = inlined_call_operand.hbm [shape: bf16[128,128], index: 3, kind: input, shape index: {}]
  %s4 = inlined_call_operand.vmem [shape: f32[1,128], index: 4, kind: input, shape index: {}]
  %s5 = inlined_call_operand.vmem [shape: f32[16,128], index: 5, kind: output, shape index: {}]
  %s6 = sld [smem:[#allocation0]]
  $region38: #{_forward.1} parent=0
    _
  %s8 = ssub.s32 1, %s6
  %s9 = scalar_select 0, %s8, %s6
  $region1: #{_forward.1} parent=0
    #allocation2 [shape = 'u8[32768]{0}', space=vmem, size = 0x8000, scoped, tag = 'input window, operand 1, single buffered']
    #allocation3 [shape = 's32[1]{0}', space=sflag, size = 0x4, scoped, tag = 'scoped memory for _forward.1']
    #allocation4 [shape = 'u8[32768]{0}', space=vmem, size = 0x8000, scoped, tag = 'input window, operand 3, single buffered']
    #allocation5 [shape = 's32[1]{0}', space=sflag, size = 0x4, scoped, tag = 'scoped memory for _forward.1']
    %10 = vsyncpa [#allocation3], 0
    %11 = vsyncpa [#allocation5], 0
    // Predicated region
    $region2: #{_forward.1} parent=1 // pred_check
      _
    $region3: #{_forward.1} parent=1 // pred_check_branch
      %13 = sbr.rel (0) target = $region5
    $region4: #{_forward.1} parent=1 // pred_region
      _
    $region5: #{_forward.1} parent=1 // pred_fallthru
      _
    // Predicated region
    $region6: #{_forward.1} parent=1 // pred_check
      _
    $region7: #{_forward.1} parent=1 // pred_check_branch
      %15 = sbr.rel (0) target = $region9
    $region8: #{_forward.1} parent=1 // pred_region
      %s17 = ssub.s32 1024, 1024
      %18 = vsyncadd [#allocation3], %s17
      %s19 = sshll.u32 [#allocation2], 4
      %s20 = int_to_ptr.vmem [resolvable:$true] %s19
      %25 = dma.hbm_to_vmem [thread:$0]  %s1, 1024, %s20, [#allocation3], 64, 64, 4
    $region9: #{_forward.1} parent=1 // pred_fallthru
      _
    // Predicated region
    $region10: #{_forward.1} parent=1 // pred_check
      _
    $region11: #{_forward.1} parent=1 // pred_check_branch
      %27 = sbr.rel (0) target = $region13
    $region12: #{_forward.1} parent=1 // pred_region
      _
    $region13: #{_forward.1} parent=1 // pred_fallthru
      _
    // Predicated region
    $region14: #{_forward.1} parent=1 // pred_check
      _
    $region15: #{_forward.1} parent=1 // pred_check_branch
      %29 = sbr.rel (0) target = $region17
    $region16: #{_forward.1} parent=1 // pred_region
      %s31 = ssub.s32 1024, 1024
      %32 = vsyncadd [#allocation5], %s31
      %s33 = sshll.u32 [#allocation4], 4
      %s34 = int_to_ptr.vmem [resolvable:$true] %s33
      %39 = dma.hbm_to_vmem [thread:$0]  %s3, 1024, %s34, [#allocation5], 64, 64, 4
    $region17: #{_forward.1} parent=1 // pred_fallthru
      _
    // Predicated region
    $region18: #{_forward.1} parent=1 // pred_check
      _
    $region19: #{_forward.1} parent=1 // pred_check_branch
      %41 = sbr.rel (0) target = $region21
    $region20: #{_forward.1} parent=1 // pred_region
      _
    $region21: #{_forward.1} parent=1 // pred_fallthru
      _
    // Predicated region
    $region22: #{_forward.1} parent=1 // pred_check
      _
    $region23: #{_forward.1} parent=1 // pred_check_branch
      %43 = sbr.rel (0) target = $region25
    $region24: #{_forward.1} parent=1 // pred_region
      %44 = dma.done [#allocation3], 1024
    $region25: #{_forward.1} parent=1 // pred_fallthru
      _
    // Predicated region
    $region26: #{_forward.1} parent=1 // pred_check
      _
    $region27: #{_forward.1} parent=1 // pred_check_branch
      %46 = sbr.rel (0) target = $region29
    $region28: #{_forward.1} parent=1 // pred_region
      %47 = dma.done [#allocation5], 1024
    $region29: #{_forward.1} parent=1 // pred_fallthru
      _
    %v49 = vld [vmem:[%s0] sm:$0xf]
    %v50 = vld [vmem:[%s0 + $0x4] sm:$0xf]
    %v51 = vld [vmem:[#allocation2] sm:$0xf]
    %v52 = vld [vmem:[#allocation2 + $0x4] sm:$0xf]
    %v53 = vld [vmem:[#allocation2 + $0x8] sm:$0xf]
    %v54 = vld [vmem:[#allocation2 + $0xc] sm:$0xf]
    %v55 = vld [vmem:[#allocation2 + $0x10] sm:$0xf]
    %v56 = vld [vmem:[#allocation2 + $0x14] sm:$0xf]
    %v57 = vld [vmem:[#allocation2 + $0x18] sm:$0xf]
    %v58 = vld [vmem:[#allocation2 + $0x1c] sm:$0xf]
    %v59 = vld [vmem:[#allocation2 + $0x20] sm:$0xf]
    %v60 = vld [vmem:[#allocation2 + $0x24] sm:$0xf]
    %v61 = vld [vmem:[#allocation2 + $0x28] sm:$0xf]
    %v62 = vld [vmem:[#allocation2 + $0x2c] sm:$0xf]
    %v63 = vld [vmem:[#allocation2 + $0x30] sm:$0xf]
    %v64 = vld [vmem:[#allocation2 + $0x34] sm:$0xf]
    %v65 = vld [vmem:[#allocation2 + $0x38] sm:$0xf]
    %v66 = vld [vmem:[#allocation2 + $0x3c] sm:$0xf]
    %v67 = vld [vmem:[%s2] sm:$0x1]
    %v69 = vlaneseq
    %v70 = vshrl.u32 %v69, 7
    %v71 = vsub.s32 0, %v70
    %v72 = vrot.slane %v67, %v71
    %v76 = vunpack.c.l.b16 %v49
    %v77 = vunpack.c.l.b16 %v50
    %v78 = vpack.c.b16 %v77, %v76
    %v96 = vunpack.c.l.b16 %v51
    %v97 = vunpack.c.l.b16 %v52
    %v98 = vunpack.c.l.b16 %v53
    %v99 = vunpack.c.l.b16 %v54
    %v100 = vunpack.c.l.b16 %v55
    %v101 = vunpack.c.l.b16 %v56
    %v102 = vunpack.c.l.b16 %v57
    %v103 = vunpack.c.l.b16 %v58
    %v104 = vunpack.c.l.b16 %v59
    %v105 = vunpack.c.l.b16 %v60
    %v106 = vunpack.c.l.b16 %v61
    %v107 = vunpack.c.l.b16 %v62
    %v108 = vunpack.c.l.b16 %v63
    %v109 = vunpack.c.l.b16 %v64
    %v110 = vunpack.c.l.b16 %v65
    %v111 = vunpack.c.l.b16 %v66
    %v112 = vpack.c.b16 %v97, %v96
    %v113 = vpack.c.b16 %v99, %v98
    %v114 = vpack.c.b16 %v101, %v100
    %v115 = vpack.c.b16 %v103, %v102
    %v116 = vpack.c.b16 %v105, %v104
    %v117 = vpack.c.b16 %v107, %v106
    %v118 = vpack.c.b16 %v109, %v108
    %v119 = vpack.c.b16 %v111, %v110
    %128 = vmatprep.subr.bf16.mxu0 0
    %129 = vmatpush1.bf16.msra.mxu0 %v119
    %130 = vmatprep.subr.bf16.mxu0 0
    %131 = vmatpush1.bf16.msra.mxu0 %v118
    %132 = vmatprep.subr.bf16.mxu0 0
    %133 = vmatpush1.bf16.msra.mxu0 %v117
    %134 = vmatprep.subr.bf16.mxu0 0
    %135 = vmatpush1.bf16.msra.mxu0 %v116
    %136 = vmatprep.subr.bf16.mxu0 0
    %137 = vmatpush1.bf16.msra.mxu0 %v115
    %138 = vmatprep.subr.bf16.mxu0 0
    %139 = vmatpush1.bf16.msra.mxu0 %v114
    %140 = vmatprep.subr.bf16.mxu0 0
    %141 = vmatpush1.bf16.msra.mxu0 %v113
    %142 = vmatprep.subr.bf16.mxu0 0
    %143 = vmatpush1.bf16.msra.mxu0 %v112
    %144 = vmatprep.subr.bf16.mxu0 0
    %145 = vmatpush2.bf16.msra.mxu0 0
    %146 = vmatprep.subr.bf16.mxu0 0
    %147 = vmatpush2.bf16.msra.mxu0 0
    %148 = vmatprep.subr.bf16.mxu0 0
    %149 = vmatpush2.bf16.msra.mxu0 0
    %150 = vmatprep.subr.bf16.mxu0 0
    %151 = vmatpush2.bf16.msra.mxu0 0
    %152 = vmatprep.subr.bf16.mxu0 0
    %153 = vmatpush2.bf16.msra.mxu0 0
    %154 = vmatprep.subr.bf16.mxu0 0
    %155 = vmatpush2.bf16.msra.mxu0 0
    %156 = vmatprep.subr.bf16.mxu0 0
    %157 = vmatpush2.bf16.msra.mxu0 0
    %158 = vmatprep.subr.bf16.mxu0 0
    %159 = vmatpush2.bf16.msra.mxu0 0
    %160 = vmatprep.mubr.bf16.mxu0 0
    %161 = vmatmul.mubr.bf16.gmra.mxu0 %v78
    %v162 = vpop.f32.mrf.mxu0
    %v163 = vadd.f32 %v72, %v162
    %v164 = vpop.f32.mrf.mxu0
    %v165 = vpop.f32.mrf.mxu0
    %v166 = vadd.f32 %v72, %v165
    %v167 = vpop.f32.mrf.mxu0
    %168 = vdwg.mxu0
    %v169 = vmax.f32 %v163, 0.0
    %v170 = vmax.f32 %v166, 0.0
    %v171 = vpack.c.bf16 %v170, %v169
    %v172 = vld [vmem:[#allocation4] sm:$0xf]
    %v173 = vld [vmem:[#allocation4 + $0x4] sm:$0xf]
    %v174 = vld [vmem:[#allocation4 + $0x8] sm:$0xf]
    %v175 = vld [vmem:[#allocation4 + $0xc] sm:$0xf]
    %v176 = vld [vmem:[#allocation4 + $0x10] sm:$0xf]
    %v177 = vld [vmem:[#allocation4 + $0x14] sm:$0xf]
    %v178 = vld [vmem:[#allocation4 + $0x18] sm:$0xf]
    %v179 = vld [vmem:[#allocation4 + $0x1c] sm:$0xf]
    %v180 = vld [vmem:[#allocation4 + $0x20] sm:$0xf]
    %v181 = vld [vmem:[#allocation4 + $0x24] sm:$0xf]
    %v182 = vld [vmem:[#allocation4 + $0x28] sm:$0xf]
    %v183 = vld [vmem:[#allocation4 + $0x2c] sm:$0xf]
    %v184 = vld [vmem:[#allocation4 + $0x30] sm:$0xf]
    %v185 = vld [vmem:[#allocation4 + $0x34] sm:$0xf]
    %v186 = vld [vmem:[#allocation4 + $0x38] sm:$0xf]
    %v187 = vld [vmem:[#allocation4 + $0x3c] sm:$0xf]
    %v188 = vld [vmem:[%s4] sm:$0x1]
    %v190 = vlaneseq
    %v191 = vshrl.u32 %v190, 7
    %v192 = vsub.s32 0, %v191
    %v193 = vrot.slane %v188, %v192
    %v211 = vunpack.c.l.b16 %v172
    %v212 = vunpack.c.l.b16 %v173
    %v213 = vunpack.c.l.b16 %v174
    %v214 = vunpack.c.l.b16 %v175
    %v215 = vunpack.c.l.b16 %v176
    %v216 = vunpack.c.l.b16 %v177
    %v217 = vunpack.c.l.b16 %v178
    %v218 = vunpack.c.l.b16 %v179
    %v219 = vunpack.c.l.b16 %v180
    %v220 = vunpack.c.l.b16 %v181
    %v221 = vunpack.c.l.b16 %v182
    %v222 = vunpack.c.l.b16 %v183
    %v223 = vunpack.c.l.b16 %v184
    %v224 = vunpack.c.l.b16 %v185
    %v225 = vunpack.c.l.b16 %v186
    %v226 = vunpack.c.l.b16 %v187
    %v227 = vpack.c.b16 %v212, %v211
    %v228 = vpack.c.b16 %v214, %v213
    %v229 = vpack.c.b16 %v216, %v215
    %v230 = vpack.c.b16 %v218, %v217
    %v231 = vpack.c.b16 %v220, %v219
    %v232 = vpack.c.b16 %v222, %v221
    %v233 = vpack.c.b16 %v224, %v223
    %v234 = vpack.c.b16 %v226, %v225
    %243 = vmatprep.subr.bf16.mxu0 0
    %244 = vmatpush1.bf16.msra.mxu0 %v234
    %245 = vmatprep.subr.bf16.mxu0 0
    %246 = vmatpush1.bf16.msra.mxu0 %v233
    %247 = vmatprep.subr.bf16.mxu0 0
    %248 = vmatpush1.bf16.msra.mxu0 %v232
    %249 = vmatprep.subr.bf16.mxu0 0
    %250 = vmatpush1.bf16.msra.mxu0 %v231
    %251 = vmatprep.subr.bf16.mxu0 0
    %252 = vmatpush1.bf16.msra.mxu0 %v230
    %253 = vmatprep.subr.bf16.mxu0 0
    %254 = vmatpush1.bf16.msra.mxu0 %v229
    %255 = vmatprep.subr.bf16.mxu0 0
    %256 = vmatpush1.bf16.msra.mxu0 %v228
    %257 = vmatprep.subr.bf16.mxu0 0
    %258 = vmatpush1.bf16.msra.mxu0 %v227
    %259 = vmatprep.subr.bf16.mxu0 0
    %260 = vmatpush2.bf16.msra.mxu0 0
    %261 = vmatprep.subr.bf16.mxu0 0
    %262 = vmatpush2.bf16.msra.mxu0 0
    %263 = vmatprep.subr.bf16.mxu0 0
    %264 = vmatpush2.bf16.msra.mxu0 0
    %265 = vmatprep.subr.bf16.mxu0 0
    %266 = vmatpush2.bf16.msra.mxu0 0
    %267 = vmatprep.subr.bf16.mxu0 0
    %268 = vmatpush2.bf16.msra.mxu0 0
    %269 = vmatprep.subr.bf16.mxu0 0
    %270 = vmatpush2.bf16.msra.mxu0 0
    %271 = vmatprep.subr.bf16.mxu0 0
    %272 = vmatpush2.bf16.msra.mxu0 0
    %273 = vmatprep.subr.bf16.mxu0 0
    %274 = vmatpush2.bf16.msra.mxu0 0
    %275 = vmatprep.mubr.bf16.mxu0 0
    %276 = vmatmul.mubr.bf16.gmra.mxu0 %v171
    %v277 = vpop.f32.mrf.mxu0
    %v278 = vadd.f32 %v193, %v277
    %v279 = vpop.f32.mrf.mxu0
    %v280 = vpop.f32.mrf.mxu0
    %v281 = vadd.f32 %v193, %v280
    %v282 = vpop.f32.mrf.mxu0
    %283 = vdwg.mxu0
    %284 = vst [vmem:[%s5] sm:$0xff] %v278
    %285 = vst [vmem:[%s5 + $0x8] sm:$0xff] %v281
    // Predicated region
    $region30: #{_forward.1} parent=1 // pred_check
      _
    $region31: #{_forward.1} parent=1 // pred_check_branch
      %287 = sbr.rel (0) target = $region33
    $region32: #{_forward.1} parent=1 // pred_region
      _
    $region33: #{_forward.1} parent=1 // pred_fallthru
      _
    // Predicated region
    $region34: #{_forward.1} parent=1 // pred_check
      _
    $region35: #{_forward.1} parent=1 // pred_check_branch
      %289 = sbr.rel (0) target = $region37
    $region36: #{_forward.1} parent=1 // pred_region
      _
    $region37: #{_forward.1} parent=1 // pred_fallthru
      _
    %290 = vsyncpa [#allocation3], 1
    %291 = vsyncpa [#allocation5], 1

</llo_original>
